<compile_context>
chip_gen: v7x
topology: tpu7x:2x2x1
jax: 0.10.0
libtpu: 0.0.40
codegen_flags: <defaults>
</compile_context>

<pallas_src>
import jax
import jax.numpy as jnp
from jax.experimental import pallas as pl
from jax.experimental.pallas import tpu as pltpu

_LANE = 128


def _lines_kernel(theta_ref, t_ref, lines_ref):
    # theta_ref: (C, 1)  VMEM-resident across all grid steps (constant index_map)
    # t_ref:     (1, TN) lane-dense tile of t
    # lines_ref: (C, TN) lane-dense output tile
    # One broadcast vmul per output vreg; the store slot / HBM writeback is
    # the binding resource, so keep the body to exactly this.
    lines_ref[...] = theta_ref[...] * t_ref[...]


def _round_up(x, m):
    return ((x + m - 1) // m) * m


def _pick_tile_n(num_clusters, n_padded, max_tile_n):
    """Largest multiple of 128 that divides n_padded, is <= max_tile_n, and
    keeps the double-buffered per-step VMEM footprint under a conservative
    budget (headroom below v7x's 64 MiB physical VMEM)."""
    budget = 40 * 1024 * 1024
    best = _LANE
    tn = _LANE
    cap = min(n_padded, max_tile_n)
    while tn <= cap:
        if n_padded % tn == 0:
            per_step = 2 * (num_clusters * tn * 4 + tn * 4) + num_clusters * 4
            if per_step <= budget:
                best = tn
        tn += _LANE
    return best


def mnist_expert_forward(z, theta, logvar_X2, t, *, force_pallas=False,
                         max_tile_n=2048):
    """Pallas implementation of MNISTExpert.forward.

    Args:
      z:          ignored input (kept for API parity with the nn.Module).
      theta:      (num_clusters,) float32 parameter.
      logvar_X2:  (num_clusters,) float32 parameter (pass-through).
      t:          (1, Ndata) float32 buffer.
      force_pallas: run the Pallas path even for tiny problems (testing).
      max_tile_n:   cap on the Ndata tile size (multiple of 128).

    Returns:
      (lines, logvar_X2) with lines of shape (num_clusters, Ndata).
    """
    del z  # unused, same as the reference forward
    num_clusters = theta.shape[0]
    ndata = t.shape[-1]

    # Avoid wrapper-side copies when inputs are already f32.
    theta_f32 = theta if theta.dtype == jnp.float32 else theta.astype(jnp.float32)
    t_f32 = t if t.dtype == jnp.float32 else t.astype(jnp.float32)
    theta_2d = theta_f32.reshape(num_clusters, 1)
    t_2d = t_f32.reshape(1, ndata)

    # Tiny problems: fixed pallas_call + grid-step overhead dwarfs the work;
    # XLA fuses this broadcast into neighbors for free.
    if not force_pallas and num_clusters * ndata < (1 << 17):
        return theta_2d * t_2d, logvar_X2

    # Pad Ndata up to a multiple of 128 so every output tile is lane-dense
    # (unmasked full-width stores); slice the pad off afterwards.
    n_padded = _round_up(ndata, _LANE)
    if n_padded != ndata:
        t_2d = jnp.pad(t_2d, ((0, 0), (0, n_padded - ndata)))

    tn = _pick_tile_n(num_clusters, n_padded, max_tile_n)
    grid = (n_padded // tn,)

    # Explicit, correct mem-bound cost model for the XLA scheduler.
    bytes_accessed = num_clusters * n_padded * 4 + n_padded * 4 + num_clusters * 4
    vmem_needed = 2 * (num_clusters * tn * 4 + tn * 4) + num_clusters * 4
    vmem_limit = min(64 * 1024 * 1024, max(2 * vmem_needed, 32 * 1024 * 1024))

    lines_padded = pl.pallas_call(
        _lines_kernel,
        out_shape=jax.ShapeDtypeStruct((num_clusters, n_padded), jnp.float32),
        grid=grid,
        in_specs=[
            # theta: constant block index -> stays resident, no per-step DMA.
            pl.BlockSpec((num_clusters, 1), lambda i: (0, 0)),
            # t: one lane-dense (1, TN) tile per grid step.
            pl.BlockSpec((1, tn), lambda i: (0, i)),
        ],
        out_specs=pl.BlockSpec((num_clusters, tn), lambda i: (0, i)),
        compiler_params=pltpu.CompilerParams(
            # Tiles along Ndata are independent -> megacore sharding on v7x.
            dimension_semantics=("parallel",),
            vmem_limit_bytes=vmem_limit,
        ),
        cost_estimate=pl.CostEstimate(
            flops=num_clusters * n_padded,
            transcendentals=0,
            bytes_accessed=bytes_accessed,
        ),
    )(theta_2d, t_2d)

    lines = lines_padded[:, :ndata] if n_padded != ndata else lines_padded

    # TODO(synk): reference keeps logvar_X2 as a float64 trainable parameter;
    # TPU Pallas works in float32, so the pass-through stays float32.
    return lines, logvar_X2


if __name__ == "__main__":
    key = jax.random.PRNGKey(0)

    # Small, module-consistent shapes.
    Ndata = 16
    num_clusters = 8
    batch = 2

    k_theta, k_z = jax.random.split(key)

    # Deterministic parameter init mirroring __init__:
    #   theta ~ N(4.5, 0.1), logvar_X2 = zeros, t = linspace(0, 1, Ndata)
    theta = (4.5 + 0.1 * jax.random.normal(k_theta, (num_clusters,))).astype(jnp.float32)
    logvar_X2 = jnp.zeros((num_clusters,), dtype=jnp.float32)
    t = jnp.linspace(0.0, 1.0, Ndata, dtype=jnp.float32).reshape(1, Ndata)

    # z is unused by the forward pass but provided for API parity.
    z = jax.random.normal(k_z, (batch, num_clusters), dtype=jnp.float32)

    # 1) Tiny module-sized shapes, forced through the Pallas path (padded to
    #    one lane-dense 128-wide tile) to exercise the kernel.
    lines, logvar_out = mnist_expert_forward(z, theta, logvar_X2, t,
                                             force_pallas=True)
    jax.block_until_ready(lines)
    jax.block_until_ready(logvar_out)

    lines_ref = theta[:, None] * t
    assert lines.shape == (num_clusters, Ndata)
    assert jnp.allclose(lines, lines_ref, atol=1e-6), "mismatch vs reference (small)"
    assert jnp.array_equal(logvar_out, logvar_X2)

    # 2) Larger Ndata with a small tile cap so the tiled/pipelined path
    #    (multiple parallel grid steps) is exercised too.
    Ndata_big = 1024
    t_big = jnp.linspace(0.0, 1.0, Ndata_big, dtype=jnp.float32).reshape(1, Ndata_big)
    lines_big, _ = mnist_expert_forward(z, theta, logvar_X2, t_big,
                                        force_pallas=True, max_tile_n=256)
    jax.block_until_ready(lines_big)
    lines_big_ref = theta[:, None] * t_big
    assert lines_big.shape == (num_clusters, Ndata_big)
    assert jnp.allclose(lines_big, lines_big_ref, atol=1e-6), "mismatch vs reference (tiled)"

    # 3) Default dispatch for the tiny problem uses plain JAX (overhead-free).
    lines_small, _ = mnist_expert_forward(z, theta, logvar_X2, t)
    jax.block_until_ready(lines_small)
    assert jnp.allclose(lines_small, lines_ref, atol=1e-6)

    print("KERNEL_OK")
</pallas_src>

<mosaic_0001>
module attributes {stable_mosaic.version = 11 : i64} {
  func.func @_lines_kernel(%arg0: i32, %arg1: memref<8x1xf32, #tpu.memory_space<vmem>>, %arg2: memref<1x128xf32, #tpu.memory_space<vmem>>, %arg3: memref<8x128xf32, #tpu.memory_space<vmem>>) attributes {dimension_semantics = [#tpu.dimension_semantics<parallel>], iteration_bounds = array<i64: 1>, scalar_prefetch = 0 : i64, scratch_operands = 0 : i64, tpu.core_type = #tpu.core_type<tc>, window_params = [{pipeline_mode = #tpu.pipeline_mode<synchronous>, transform_indices = @transform_0, window_bounds = array<i64: 8, 1>}, {transform_indices = @transform_1, window_bounds = array<i64: 1, 128>}, {transform_indices = @transform_2, window_bounds = array<i64: 8, 128>}]} {
    %c0 = arith.constant 0 : index
    %c0_0 = arith.constant 0 : index
    %0 = vector.load %arg1[%c0, %c0_0] : memref<8x1xf32, #tpu.memory_space<vmem>>, vector<8x1xf32>
    %c0_1 = arith.constant 0 : index
    %c0_2 = arith.constant 0 : index
    %1 = vector.load %arg2[%c0_1, %c0_2] : memref<1x128xf32, #tpu.memory_space<vmem>>, vector<1x128xf32>
    %2 = vector.broadcast %0 : vector<8x1xf32> to vector<8x128xf32>
    %3 = vector.broadcast %1 : vector<1x128xf32> to vector<8x128xf32>
    %4 = arith.mulf %2, %3 : vector<8x128xf32>
    %c0_3 = arith.constant 0 : index
    %c0_4 = arith.constant 0 : index
    %5 = vector.load %arg3[%c0_3, %c0_4] : memref<8x128xf32, #tpu.memory_space<vmem>>, vector<8x128xf32>
    tpu.vector_store %arg3[%c0_3, %c0_4], %4 {strides = array<i32>} : memref<8x128xf32, #tpu.memory_space<vmem>>, vector<8x128xf32>,
    return
  }
  func.func @transform_0(%arg0: i32) -> (i32, i32) {
    %c0_i32 = arith.constant 0 : i32
    %c0_i32_0 = arith.constant 0 : i32
    %c0_i32_1 = arith.constant 0 : i32
    return %c0_i32, %c0_i32_0 : i32, i32
  }
  func.func @transform_1(%arg0: i32) -> (i32, i32) {
    %c0_i32 = arith.constant 0 : i32
    %c0_i32_0 = arith.constant 0 : i32
    return %c0_i32, %arg0 : i32, i32
  }
  func.func @transform_2(%arg0: i32) -> (i32, i32) {
    %c0_i32 = arith.constant 0 : i32
    %c0_i32_0 = arith.constant 0 : i32
    return %c0_i32, %arg0 : i32, i32
  }
}

</mosaic_0001>

<llo_original>
// kernel: tpu_custom_call.1
$region0: #{tpu_custom_call.1}
  #allocation0 [shape = 'u32[]', space=smem, size = 0x4, offset = 0x4, fixed_abs, tag = 'smem constant byte address 0x4 - core index']
  #allocation1 [shape = 'u32[144,128]{1,0:T(1,128)}', space=vmem, size = 0x12000, scoped, tag = 'internal scratch']
  %s0 = inlined_call_operand.vmem [shape: f32[8,1], index: 0, kind: input, shape index: {}]
  %s1 = inlined_call_operand.vmem [shape: f32[1,128], index: 1, kind: input, shape index: {}]
  %s2 = inlined_call_operand.hbm [shape: f32[8,128], index: 2, kind: output, shape index: {}]
  %s3 = sld [smem:[#allocation0]]
  $region18: #{tpu_custom_call.1} parent=0
    _
  %s5 = ssub.s32 1, %s3
  %s6 = scalar_select 0, %s5, %s3
  $region1: #{tpu_custom_call.1} parent=0
    #allocation2 [shape = 'u8[4096]{0}', space=vmem, size = 0x1000, scoped, tag = 'output window, operand 0, single buffered']
    #allocation3 [shape = 's32[1]{0}', space=sflag, size = 0x4, scoped, tag = 'scoped memory for tpu_custom_call.1']
    %7 = vsyncpa [#allocation3], 0
    // Predicated region
    $region2: #{tpu_custom_call.1} parent=1 // pred_check
      _
    $region3: #{tpu_custom_call.1} parent=1 // pred_check_branch
      %9 = sbr.rel (0) target = $region5
    $region4: #{tpu_custom_call.1} parent=1 // pred_region
      _
    $region5: #{tpu_custom_call.1} parent=1 // pred_fallthru
      _
    // Predicated region
    $region6: #{tpu_custom_call.1} parent=1 // pred_check
      _
    $region7: #{tpu_custom_call.1} parent=1 // pred_check_branch
      %11 = sbr.rel (0) target = $region9
    $region8: #{tpu_custom_call.1} parent=1 // pred_region
      _
    $region9: #{tpu_custom_call.1} parent=1 // pred_fallthru
      _
    %v12 = vld [vmem:[%s0] sm:$0xff]
    %v13 = vld [vmem:[%s1] sm:$0x1]
    %15 = vset.pattern.permute.xlu0 0
    %16 = vperm.xlu0 %15, %v12
    %v17 = vpop.permute.xlu0 %16
    %v20 = vlaneseq
    %v21 = vshrl.u32 %v20, 7
    %v22 = vsub.s32 0, %v21
    %v23 = vrot.slane %v13, %v22
    %v25 = vmul.f32 %v17, %v23
    %26 = vst [vmem:[#allocation2] sm:$0xff] %v25
    // Predicated region
    $region10: #{tpu_custom_call.1} parent=1 // pred_check
      _
    $region11: #{tpu_custom_call.1} parent=1 // pred_check_branch
      %28 = sbr.rel (0) target = $region13
    $region12: #{tpu_custom_call.1} parent=1 // pred_region
      %s30 = ssub.s32 128, 128
      %31 = vsyncadd [#allocation3], %s30
      %s33 = sshll.u32 [#allocation2], 4
      %s34 = int_to_ptr.vmem [resolvable:$true] %s33
      %36 = dma.vmem_to_hbm [thread:$0]  %s34, 128, %s2, [#allocation3]
    $region13: #{tpu_custom_call.1} parent=1 // pred_fallthru
      _
    // Predicated region
    $region14: #{tpu_custom_call.1} parent=1 // pred_check
      _
    $region15: #{tpu_custom_call.1} parent=1 // pred_check_branch
      %38 = sbr.rel (0) target = $region17
    $region16: #{tpu_custom_call.1} parent=1 // pred_region
      %39 = dma.done [#allocation3], 128
    $region17: #{tpu_custom_call.1} parent=1 // pred_fallthru
      _
    %40 = vsyncpa [#allocation3], 1

</llo_original>
